<compile_context>
chip_gen: v7x
topology: tpu7x:2x2x1
jax: 0.10.0
libtpu: 0.0.40
codegen_flags: <defaults>
</compile_context>

<pallas_src>
import functools

import jax
import jax.numpy as jnp
from jax.experimental import pallas as pl
from jax.experimental.pallas import tpu as pltpu


def _round_up(n: int, m: int) -> int:
    return (n + m - 1) // m * m


def _hash_u32(z: jnp.ndarray) -> jnp.ndarray:
    """lowbias32-style integer mixer; input/output uint32. Pure VPU ops."""
    z = z ^ (z >> 16)
    z = z * jnp.uint32(0x7FEB352D)
    z = z ^ (z >> 15)
    z = z * jnp.uint32(0x846CA68B)
    z = z ^ (z >> 16)
    return z


def _dropout_keep_mask(global_idx_u32: jnp.ndarray, seed_u32: jnp.ndarray, p: float):
    """Deterministic Bernoulli(1-p) keep mask from element index + seed."""
    threshold = jnp.uint32(min(int(p * float(2 ** 32)), 2 ** 32 - 1))
    bits = _hash_u32(global_idx_u32 + seed_u32 * jnp.uint32(0x9E3779B9))
    return bits >= threshold


def _ffn_kernel(seed_ref, x_ref, w1_ref, b1_ref, w2_ref, b2_ref, o_ref, *, p: float, d_ff: int):
    # x_ref: (tm, d_model)   w1_ref: (d_model, d_ff)   b1_ref: (1, d_ff)
    # w2_ref: (d_ff, d_model) b2_ref: (1, d_model)     o_ref: (tm, d_model)

    # linear1 + ReLU (accumulate in f32 on the MXU).
    h = jnp.dot(x_ref[...], w1_ref[...], preferred_element_type=jnp.float32)
    h = jnp.maximum(h + b1_ref[...], 0.0)

    if p > 0.0:
        # Inverted dropout on the hidden activation (training-mode nn.Dropout).
        tm = h.shape[0]
        row = jax.lax.broadcasted_iota(jnp.int32, h.shape, 0) + pl.program_id(0) * tm
        col = jax.lax.broadcasted_iota(jnp.int32, h.shape, 1)
        gidx = row.astype(jnp.uint32) * jnp.uint32(d_ff) + col.astype(jnp.uint32)
        keep = _dropout_keep_mask(gidx, seed_ref[0].astype(jnp.uint32), p)
        h = jnp.where(keep, h * jnp.float32(1.0 / (1.0 - p)), jnp.zeros_like(h))

    # linear2.
    y = jnp.dot(h, w2_ref[...], preferred_element_type=jnp.float32) + b2_ref[...]
    o_ref[...] = y.astype(o_ref.dtype)


def positionwise_feed_forward(x, w1, b1, w2, b2, *, dropout_p: float = 0.0,
                              seed: int = 0, block_rows: int = 512):
    """x: [..., d_model].  w1: [d_model, d_ff], b1: [d_ff], w2: [d_ff, d_model], b2: [d_model]."""
    d_model, d_ff = w1.shape
    assert x.shape[-1] == d_model
    assert w2.shape == (d_ff, d_model)
    assert block_rows % 8 == 0

    orig_shape = x.shape
    x2 = x.reshape(-1, d_model)          # lane-dense [rows, d_model] slab
    n_rows = x2.shape[0]

    tm = min(block_rows, _round_up(n_rows, 8))
    n_pad = _round_up(n_rows, tm)
    if n_pad != n_rows:
        x2 = jnp.pad(x2, ((0, n_pad - n_rows), (0, 0)))

    grid = (n_pad // tm,)
    kernel = functools.partial(_ffn_kernel, p=float(dropout_p), d_ff=int(d_ff))
    seed_arr = jnp.array([seed], dtype=jnp.int32)

    b1_2d = b1.reshape(1, d_ff)
    b2_2d = b2.reshape(1, d_model)

    out = pl.pallas_call(
        kernel,
        out_shape=jax.ShapeDtypeStruct((n_pad, d_model), x.dtype),
        grid_spec=pltpu.PrefetchScalarGridSpec(
            num_scalar_prefetch=1,                       # dropout seed lands in SMEM
            grid=grid,
            in_specs=[
                pl.BlockSpec((tm, d_model), lambda i, seed: (i, 0)),     # x row tile
                pl.BlockSpec((d_model, d_ff), lambda i, seed: (0, 0)),   # w1 (resident)
                pl.BlockSpec((1, d_ff), lambda i, seed: (0, 0)),         # b1 (resident)
                pl.BlockSpec((d_ff, d_model), lambda i, seed: (0, 0)),   # w2 (resident)
                pl.BlockSpec((1, d_model), lambda i, seed: (0, 0)),      # b2 (resident)
            ],
            out_specs=pl.BlockSpec((tm, d_model), lambda i, seed: (i, 0)),
        ),
        compiler_params=pltpu.CompilerParams(
            # Stateless per-element hash PRNG -> order-independent -> megacore-shardable.
            dimension_semantics=("parallel",),
        ),
    )(seed_arr, x2, w1, b1_2d, w2, b2_2d)

    if n_pad != n_rows:
        out = out[:n_rows]
    return out.reshape(orig_shape)


def _reference(x, w1, b1, w2, b2, p, seed):
    """Pure-JAX reference, replicating the kernel's deterministic dropout mask."""
    d_model, d_ff = w1.shape
    x2 = x.reshape(-1, d_model)
    h = jnp.maximum(x2 @ w1 + b1[None, :], 0.0)
    if p > 0.0:
        n = x2.shape[0]
        gidx = (jnp.arange(n, dtype=jnp.uint32)[:, None] * jnp.uint32(d_ff)
                + jnp.arange(d_ff, dtype=jnp.uint32)[None, :])
        keep = _dropout_keep_mask(gidx, jnp.uint32(seed), p)
        h = jnp.where(keep, h * (1.0 / (1.0 - p)), 0.0)
    y = h @ w2 + b2[None, :]
    return y.reshape(x.shape)


if __name__ == "__main__":
    # Small shapes consistent with the module: [batch, seq, d_model], d_ff = 2*d_model.
    B, S, d_model, d_ff = 2, 8, 128, 256
    dropout_p = 0.1

    key = jax.random.PRNGKey(0)
    kx, k1, k2, k3, k4 = jax.random.split(key, 5)
    x = jax.random.normal(kx, (B, S, d_model), dtype=jnp.float32)
    w1 = jax.random.normal(k1, (d_model, d_ff), dtype=jnp.float32) / jnp.sqrt(float(d_model))
    b1 = 0.1 * jax.random.normal(k2, (d_ff,), dtype=jnp.float32)
    w2 = jax.random.normal(k3, (d_ff, d_model), dtype=jnp.float32) / jnp.sqrt(float(d_ff))
    b2 = 0.1 * jax.random.normal(k4, (d_model,), dtype=jnp.float32)

    # 1) Eval path (dropout disabled): matmul + bias + ReLU + matmul + bias vs reference.
    out_eval = jax.block_until_ready(
        positionwise_feed_forward(x, w1, b1, w2, b2, dropout_p=0.0))
    ref_eval = _reference(x, w1, b1, w2, b2, 0.0, 0)
    assert out_eval.shape == (B, S, d_model)
    assert jnp.allclose(out_eval, ref_eval, atol=1e-2, rtol=1e-2), \
        float(jnp.max(jnp.abs(out_eval - ref_eval)))

    # 2) Training path: deterministic hash-dropout on the hidden layer, checked
    #    against a reference that reproduces the exact same mask.
    out_train = jax.block_until_ready(
        positionwise_feed_forward(x, w1, b1, w2, b2, dropout_p=dropout_p, seed=1234))
    ref_train = _reference(x, w1, b1, w2, b2, dropout_p, 1234)
    assert out_train.shape == (B, S, d_model)
    assert jnp.allclose(out_train, ref_train, atol=1e-2, rtol=1e-2), \
        float(jnp.max(jnp.abs(out_train - ref_train)))
    # Dropout actually did something, and is deterministic given the seed.
    assert not jnp.allclose(out_train, out_eval, atol=1e-4)
    out_train2 = jax.block_until_ready(
        positionwise_feed_forward(x, w1, b1, w2, b2, dropout_p=dropout_p, seed=1234))
    assert jnp.array_equal(out_train, out_train2)

    print("KERNEL_OK")
</pallas_src>

<mosaic_0001>
module attributes {stable_mosaic.version = 11 : i64} {
  func.func @_ffn_kernel(%arg0: i32, %arg1: memref<1xi32, #tpu.memory_space<smem>>, %arg2: memref<16x128xf32, #tpu.memory_space<vmem>>, %arg3: memref<128x256xf32, #tpu.memory_space<vmem>>, %arg4: memref<1x256xf32, #tpu.memory_space<vmem>>, %arg5: memref<256x128xf32, #tpu.memory_space<vmem>>, %arg6: memref<1x128xf32, #tpu.memory_space<vmem>>, %arg7: memref<16x128xf32, #tpu.memory_space<vmem>>) attributes {dimension_semantics = [#tpu.dimension_semantics<parallel>], iteration_bounds = array<i64: 1>, scalar_prefetch = 1 : i64, scratch_operands = 0 : i64, tpu.core_type = #tpu.core_type<tc>, window_params = [{transform_indices = @transform_0, window_bounds = array<i64: 16, 128>}, {pipeline_mode = #tpu.pipeline_mode<synchronous>, transform_indices = @transform_1, window_bounds = array<i64: 128, 256>}, {pipeline_mode = #tpu.pipeline_mode<synchronous>, transform_indices = @transform_2, window_bounds = array<i64: 1, 256>}, {pipeline_mode = #tpu.pipeline_mode<synchronous>, transform_indices = @transform_3, window_bounds = array<i64: 256, 128>}, {pipeline_mode = #tpu.pipeline_mode<synchronous>, transform_indices = @transform_4, window_bounds = array<i64: 1, 128>}, {transform_indices = @transform_5, window_bounds = array<i64: 16, 128>}]} {
    %c0 = arith.constant 0 : index
    %c0_0 = arith.constant 0 : index
    %0 = vector.load %arg2[%c0, %c0_0] : memref<16x128xf32, #tpu.memory_space<vmem>>, vector<16x128xf32>
    %c0_1 = arith.constant 0 : index
    %c0_2 = arith.constant 0 : index
    %1 = vector.load %arg3[%c0_1, %c0_2] : memref<128x256xf32, #tpu.memory_space<vmem>>, vector<128x256xf32>
    %cst = arith.constant dense<0.000000e+00> : vector<16x256xf32>
    %2 = tpu.matmul %0, %1, %cst {dimension_numbers = #tpu.dot_dimension_numbers<[1], [0], [0], [1], [0, 0, 1, 1], [], []>} : vector<16x128xf32>, vector<128x256xf32>, vector<16x256xf32> -> vector<16x256xf32>
    %c0_3 = arith.constant 0 : index
    %c0_4 = arith.constant 0 : index
    %3 = vector.load %arg4[%c0_3, %c0_4] : memref<1x256xf32, #tpu.memory_space<vmem>>, vector<1x256xf32>
    %4 = vector.broadcast %3 : vector<1x256xf32> to vector<16x256xf32>
    %5 = arith.addf %2, %4 : vector<16x256xf32>
    %cst_5 = arith.constant 0.000000e+00 : f32
    %6 = vector.broadcast %cst_5 : f32 to vector<16x256xf32>
    %7 = arith.maximumf %5, %6 : vector<16x256xf32>
    %c0_6 = arith.constant 0 : index
    %c0_7 = arith.constant 0 : index
    %8 = vector.load %arg5[%c0_6, %c0_7] : memref<256x128xf32, #tpu.memory_space<vmem>>, vector<256x128xf32>
    %cst_8 = arith.constant dense<0.000000e+00> : vector<16x128xf32>
    %9 = tpu.matmul %7, %8, %cst_8 {dimension_numbers = #tpu.dot_dimension_numbers<[1], [0], [0], [1], [0, 0, 1, 1], [], []>} : vector<16x256xf32>, vector<256x128xf32>, vector<16x128xf32> -> vector<16x128xf32>
    %c0_9 = arith.constant 0 : index
    %c0_10 = arith.constant 0 : index
    %10 = vector.load %arg6[%c0_9, %c0_10] : memref<1x128xf32, #tpu.memory_space<vmem>>, vector<1x128xf32>
    %11 = vector.broadcast %10 : vector<1x128xf32> to vector<16x128xf32>
    %12 = arith.addf %9, %11 : vector<16x128xf32>
    %c0_11 = arith.constant 0 : index
    %c0_12 = arith.constant 0 : index
    %13 = vector.load %arg7[%c0_11, %c0_12] : memref<16x128xf32, #tpu.memory_space<vmem>>, vector<16x128xf32>
    tpu.vector_store %arg7[%c0_11, %c0_12], %12 {strides = array<i32>} : memref<16x128xf32, #tpu.memory_space<vmem>>, vector<16x128xf32>,
    return
  }
  func.func @transform_0(%arg0: i32, %arg1: memref<1xi32, #tpu.memory_space<smem>>) -> (i32, i32) {
    %c0_i32 = arith.constant 0 : i32
    %c0_i32_0 = arith.constant 0 : i32
    return %arg0, %c0_i32 : i32, i32
  }
  func.func @transform_1(%arg0: i32, %arg1: memref<1xi32, #tpu.memory_space<smem>>) -> (i32, i32) {
    %c0_i32 = arith.constant 0 : i32
    %c0_i32_0 = arith.constant 0 : i32
    %c0_i32_1 = arith.constant 0 : i32
    return %c0_i32, %c0_i32_0 : i32, i32
  }
  func.func @transform_2(%arg0: i32, %arg1: memref<1xi32, #tpu.memory_space<smem>>) -> (i32, i32) {
    %c0_i32 = arith.constant 0 : i32
    %c0_i32_0 = arith.constant 0 : i32
    %c0_i32_1 = arith.constant 0 : i32
    return %c0_i32, %c0_i32_0 : i32, i32
  }
  func.func @transform_3(%arg0: i32, %arg1: memref<1xi32, #tpu.memory_space<smem>>) -> (i32, i32) {
    %c0_i32 = arith.constant 0 : i32
    %c0_i32_0 = arith.constant 0 : i32
    %c0_i32_1 = arith.constant 0 : i32
    return %c0_i32, %c0_i32_0 : i32, i32
  }
  func.func @transform_4(%arg0: i32, %arg1: memref<1xi32, #tpu.memory_space<smem>>) -> (i32, i32) {
    %c0_i32 = arith.constant 0 : i32
    %c0_i32_0 = arith.constant 0 : i32
    %c0_i32_1 = arith.constant 0 : i32
    return %c0_i32, %c0_i32_0 : i32, i32
  }
  func.func @transform_5(%arg0: i32, %arg1: memref<1xi32, #tpu.memory_space<smem>>) -> (i32, i32) {
    %c0_i32 = arith.constant 0 : i32
    %c0_i32_0 = arith.constant 0 : i32
    return %arg0, %c0_i32 : i32, i32
  }
}

</mosaic_0001>

<llo_original>
// kernel: tpu_custom_call.1
$region0: #{tpu_custom_call.1}
  #allocation0 [shape = 'u32[]', space=smem, size = 0x4, offset = 0x4, fixed_abs, tag = 'smem constant byte address 0x4 - core index']
  #allocation1 [shape = 'u32[144,128]{1,0:T(1,128)}', space=vmem, size = 0x12000, scoped, tag = 'internal scratch']
  #allocation2 [shape = 's32[1]{0}', space=sflag, size = 0x4, scoped, tag = 'scoped memory for tpu_custom_call.1']
  #allocation3 [shape = 's32[1]{0:T(128)S(6)}', space=smem, size = 0x200, scoped, tag = 'prefetched SMEM operand 0']
  %s0 = inlined_call_operand.<no memory space> [shape: s32[1], index: 0, kind: input, shape index: {}]
  %s1 = inlined_call_operand.hbm [shape: f32[16,128], index: 1, kind: input, shape index: {}]
  %s2 = inlined_call_operand.hbm [shape: f32[128,256], index: 2, kind: input, shape index: {}]
  %s3 = inlined_call_operand.vmem [shape: f32[1,256], index: 3, kind: input, shape index: {}]
  %s4 = inlined_call_operand.hbm [shape: f32[256,128], index: 4, kind: input, shape index: {}]
  %s5 = inlined_call_operand.vmem [shape: f32[1,128], index: 5, kind: input, shape index: {}]
  %s6 = inlined_call_operand.hbm [shape: f32[16,128], index: 6, kind: output, shape index: {}]
  %s7 = sld [smem:[#allocation0]]
  $region42: #{tpu_custom_call.1} parent=0
    _
  %s9 = ssub.s32 1, %s7
  %s10 = scalar_select 0, %s9, %s7
  %11 = sst [smem:[#allocation3]] %s0
  $region1: #{tpu_custom_call.1} parent=0
    #allocation4 [shape = 'u8[8192]{0}', space=vmem, size = 0x2000, scoped, tag = 'input window, operand 1, single buffered']
    #allocation5 [shape = 's32[1]{0}', space=sflag, size = 0x4, scoped, tag = 'scoped memory for tpu_custom_call.1']
    #allocation6 [shape = 's32[1]{0}', space=sflag, size = 0x4, scoped, tag = 'scoped memory for tpu_custom_call.1']
    #allocation7 [shape = 'u8[131072]{0}', space=vmem, size = 0x20000, scoped, tag = 'input window, operand 2, single buffered']
    #allocation8 [shape = 's32[1]{0}', space=sflag, size = 0x4, scoped, tag = 'scoped memory for tpu_custom_call.1']
    #allocation9 [shape = 'u8[131072]{0}', space=vmem, size = 0x20000, scoped, tag = 'input window, operand 4, single buffered']
    #allocation10 [shape = 'u8[8192]{0}', space=vmem, size = 0x2000, scoped, tag = 'output window, operand 0, single buffered']
    %12 = vsyncpa [#allocation5], 0
    %13 = vsyncpa [#allocation8], 0
    %14 = vsyncpa [#allocation6], 0
    // Predicated region
    $region2: #{tpu_custom_call.1} parent=1 // pred_check
      _
    $region3: #{tpu_custom_call.1} parent=1 // pred_check_branch
      %16 = sbr.rel (0) target = $region5
    $region4: #{tpu_custom_call.1} parent=1 // pred_region
      %s18 = ssub.s32 256, 256
      %19 = vsyncadd [#allocation5], %s18
      %s20 = sshll.u32 [#allocation4], 4
      %s21 = int_to_ptr.vmem [resolvable:$true] %s20
      %26 = dma.hbm_to_vmem [thread:$0]  %s1, 256, %s21, [#allocation5], 128, 128, 8
    $region5: #{tpu_custom_call.1} parent=1 // pred_fallthru
      _
    // Predicated region
    $region6: #{tpu_custom_call.1} parent=1 // pred_check
      _
    $region7: #{tpu_custom_call.1} parent=1 // pred_check_branch
      %28 = sbr.rel (0) target = $region9
    $region8: #{tpu_custom_call.1} parent=1 // pred_region
      %s30 = ssub.s32 4096, 4096
      %31 = vsyncadd [#allocation8], %s30
      %s32 = sshll.u32 [#allocation7], 4
      %s33 = int_to_ptr.vmem [resolvable:$true] %s32
      %38 = dma.hbm_to_vmem [thread:$0]  %s2, 4096, %s33, [#allocation8], 256, 256, 16
    $region9: #{tpu_custom_call.1} parent=1 // pred_fallthru
      _
    // Predicated region
    $region10: #{tpu_custom_call.1} parent=1 // pred_check
      _
    $region11: #{tpu_custom_call.1} parent=1 // pred_check_branch
      %40 = sbr.rel (0) target = $region13
    $region12: #{tpu_custom_call.1} parent=1 // pred_region
      _
    $region13: #{tpu_custom_call.1} parent=1 // pred_fallthru
      _
    // Predicated region
    $region14: #{tpu_custom_call.1} parent=1 // pred_check
      _
    $region15: #{tpu_custom_call.1} parent=1 // pred_check_branch
      %42 = sbr.rel (0) target = $region17
    $region16: #{tpu_custom_call.1} parent=1 // pred_region
      %s44 = ssub.s32 4096, 4096
      %45 = vsyncadd [#allocation8], %s44
      %s46 = sshll.u32 [#allocation9], 4
      %s47 = int_to_ptr.vmem [resolvable:$true] %s46
      %52 = dma.hbm_to_vmem [thread:$0]  %s4, 4096, %s47, [#allocation8], 128, 128, 8
    $region17: #{tpu_custom_call.1} parent=1 // pred_fallthru
      _
    // Predicated region
    $region18: #{tpu_custom_call.1} parent=1 // pred_check
      _
    $region19: #{tpu_custom_call.1} parent=1 // pred_check_branch
      %54 = sbr.rel (0) target = $region21
    $region20: #{tpu_custom_call.1} parent=1 // pred_region
      _
    $region21: #{tpu_custom_call.1} parent=1 // pred_fallthru
      _
    // Predicated region
    $region22: #{tpu_custom_call.1} parent=1 // pred_check
      _
    $region23: #{tpu_custom_call.1} parent=1 // pred_check_branch
      %56 = sbr.rel (0) target = $region25
    $region24: #{tpu_custom_call.1} parent=1 // pred_region
      %57 = dma.done [#allocation5], 256
    $region25: #{tpu_custom_call.1} parent=1 // pred_fallthru
      _
    // Predicated region
    $region26: #{tpu_custom_call.1} parent=1 // pred_check
      _
    $region27: #{tpu_custom_call.1} parent=1 // pred_check_branch
      %59 = sbr.rel (0) target = $region29
    $region28: #{tpu_custom_call.1} parent=1 // pred_region
      %60 = dma.done [#allocation8], 4096
    $region29: #{tpu_custom_call.1} parent=1 // pred_fallthru
      _
    // Predicated region
    $region30: #{tpu_custom_call.1} parent=1 // pred_check
      _
    $region31: #{tpu_custom_call.1} parent=1 // pred_check_branch
      %62 = sbr.rel (0) target = $region33
    $region32: #{tpu_custom_call.1} parent=1 // pred_region
      %63 = dma.done [#allocation8], 4096
    $region33: #{tpu_custom_call.1} parent=1 // pred_fallthru
      _
    %v64 = vld [vmem:[#allocation4] sm:$0xff]
    %v65 = vld [vmem:[#allocation4 + $0x8] sm:$0xff]
    %v66 = vld [vmem:[#allocation7] sm:$0xff]
    %v67 = vld [vmem:[#allocation7 + $0x8] sm:$0xff]
    %v68 = vld [vmem:[#allocation7 + $0x10] sm:$0xff]
    %v69 = vld [vmem:[#allocation7 + $0x18] sm:$0xff]
    %v70 = vld [vmem:[#allocation7 + $0x20] sm:$0xff]
    %v71 = vld [vmem:[#allocation7 + $0x28] sm:$0xff]
    %v72 = vld [vmem:[#allocation7 + $0x30] sm:$0xff]
    %v73 = vld [vmem:[#allocation7 + $0x38] sm:$0xff]
    %v74 = vld [vmem:[#allocation7 + $0x40] sm:$0xff]
    %v75 = vld [vmem:[#allocation7 + $0x48] sm:$0xff]
    %v76 = vld [vmem:[#allocation7 + $0x50] sm:$0xff]
    %v77 = vld [vmem:[#allocation7 + $0x58] sm:$0xff]
    %v78 = vld [vmem:[#allocation7 + $0x60] sm:$0xff]
    %v79 = vld [vmem:[#allocation7 + $0x68] sm:$0xff]
    %v80 = vld [vmem:[#allocation7 + $0x70] sm:$0xff]
    %v81 = vld [vmem:[#allocation7 + $0x78] sm:$0xff]
    %v82 = vld [vmem:[#allocation7 + $0x80] sm:$0xff]
    %v83 = vld [vmem:[#allocation7 + $0x88] sm:$0xff]
    %v84 = vld [vmem:[#allocation7 + $0x90] sm:$0xff]
    %v85 = vld [vmem:[#allocation7 + $0x98] sm:$0xff]
    %v86 = vld [vmem:[#allocation7 + $0xa0] sm:$0xff]
    %v87 = vld [vmem:[#allocation7 + $0xa8] sm:$0xff]
    %v88 = vld [vmem:[#allocation7 + $0xb0] sm:$0xff]
    %v89 = vld [vmem:[#allocation7 + $0xb8] sm:$0xff]
    %v90 = vld [vmem:[#allocation7 + $0xc0] sm:$0xff]
    %v91 = vld [vmem:[#allocation7 + $0xc8] sm:$0xff]
    %v92 = vld [vmem:[#allocation7 + $0xd0] sm:$0xff]
    %v93 = vld [vmem:[#allocation7 + $0xd8] sm:$0xff]
    %v94 = vld [vmem:[#allocation7 + $0xe0] sm:$0xff]
    %v95 = vld [vmem:[#allocation7 + $0xe8] sm:$0xff]
    %v96 = vld [vmem:[#allocation7 + $0xf0] sm:$0xff]
    %v97 = vld [vmem:[#allocation7 + $0xf8] sm:$0xff]
    %v98 = vld [vmem:[%s3] sm:$0x3]
    %v100 = vlaneseq
    %v101 = vshrl.u32 %v100, 7
    %v102 = vsub.s32 0, %v101
    %v103 = vrot.slane %v98, %v102
    %v104 = vlaneseq
    %v105 = vshrl.u32 %v104, 7
    %v106 = vsub.s32 1, %v105
    %v107 = vrot.slane %v98, %v106
    %110 = vmatprep.subr.mxu0 %v67
    %111 = vmatpush1.msra.mxu0 %v66
    %112 = vmatprep.subr.mxu0 %v69
    %113 = vmatpush1.msra.mxu0 %v68
    %114 = vmatprep.subr.mxu0 %v71
    %115 = vmatpush1.msra.mxu0 %v70
    %116 = vmatprep.subr.mxu0 %v73
    %117 = vmatpush1.msra.mxu0 %v72
    %118 = vmatprep.subr.mxu0 %v75
    %119 = vmatpush1.msra.mxu0 %v74
    %120 = vmatprep.subr.mxu0 %v77
    %121 = vmatpush1.msra.mxu0 %v76
    %122 = vmatprep.subr.mxu0 %v79
    %123 = vmatpush1.msra.mxu0 %v78
    %124 = vmatprep.subr.mxu0 %v81
    %125 = vmatpush1.msra.mxu0 %v80
    %126 = vmatprep.subr.mxu0 %v83
    %127 = vmatpush1.msra.mxu0 %v82
    %128 = vmatprep.subr.mxu0 %v85
    %129 = vmatpush1.msra.mxu0 %v84
    %130 = vmatprep.subr.mxu0 %v87
    %131 = vmatpush1.msra.mxu0 %v86
    %132 = vmatprep.subr.mxu0 %v89
    %133 = vmatpush1.msra.mxu0 %v88
    %134 = vmatprep.subr.mxu0 %v91
    %135 = vmatpush1.msra.mxu0 %v90
    %136 = vmatprep.subr.mxu0 %v93
    %137 = vmatpush1.msra.mxu0 %v92
    %138 = vmatprep.subr.mxu0 %v95
    %139 = vmatpush1.msra.mxu0 %v94
    %140 = vmatprep.subr.mxu0 %v97
    %141 = vmatpush1.msra.mxu0 %v96
    %142 = vmatprep.subr.mxu0 0.0
    %143 = vmatpush1.msra.mxu0 0.0
    %144 = vmatprep.subr.mxu0 0.0
    %145 = vmatpush1.msra.mxu0 0.0
    %146 = vmatprep.subr.mxu0 0.0
    %147 = vmatpush1.msra.mxu0 0.0
    %148 = vmatprep.subr.mxu0 0.0
    %149 = vmatpush1.msra.mxu0 0.0
    %150 = vmatprep.subr.mxu0 0.0
    %151 = vmatpush1.msra.mxu0 0.0
    %152 = vmatprep.subr.mxu0 0.0
    %153 = vmatpush1.msra.mxu0 0.0
    %154 = vmatprep.subr.mxu0 0.0
    %155 = vmatpush1.msra.mxu0 0.0
    %156 = vmatprep.subr.mxu0 0.0
    %157 = vmatpush1.msra.mxu0 0.0
    %158 = vmatprep.subr.mxu0 0.0
    %159 = vmatpush1.msra.mxu0 0.0
    %160 = vmatprep.subr.mxu0 0.0
    %161 = vmatpush1.msra.mxu0 0.0
    %162 = vmatprep.subr.mxu0 0.0
    %163 = vmatpush1.msra.mxu0 0.0
    %164 = vmatprep.subr.mxu0 0.0
    %165 = vmatpush1.msra.mxu0 0.0
    %166 = vmatprep.subr.mxu0 0.0
    %167 = vmatpush1.msra.mxu0 0.0
    %168 = vmatprep.subr.mxu0 0.0
    %169 = vmatpush1.msra.mxu0 0.0
    %170 = vmatprep.subr.mxu0 0.0
    %171 = vmatpush1.msra.mxu0 0.0
    %172 = vmatprep.subr.mxu0 0.0
    %173 = vmatpush1.msra.mxu0 0.0
    %174 = vmatprep.mubr.f32.mxu0 0.0
    %175 = vmatmul.mubr.f32.gmra.mrb[0].mxu0 %v64
    %v176 = vpop.f32.mrb[0].mxu0
    %v177 = vadd.f32 %v103, %v176
    %v178 = vpop.f32.mrb[0].mxu0
    %v179 = vadd.f32 %v107, %v178
    %180 = vmatprep.mubr.f32.mxu0 0.0
    %181 = vmatmul.mubr.f32.gmra.mrb[0].mxu0 %v65
    %v182 = vpop.f32.mrb[0].mxu0
    %v183 = vadd.f32 %v103, %v182
    %v184 = vpop.f32.mrb[0].mxu0
    %v185 = vadd.f32 %v107, %v184
    %186 = vdwg.mxu0
    %v187 = vmax.f32 %v177, 0.0
    %v188 = vmax.f32 %v179, 0.0
    %v189 = vmax.f32 %v183, 0.0
    %v190 = vmax.f32 %v185, 0.0
    %v191 = vld [vmem:[#allocation9] sm:$0xff]
    %v192 = vld [vmem:[#allocation9 + $0x8] sm:$0xff]
    %v193 = vld [vmem:[#allocation9 + $0x10] sm:$0xff]
    %v194 = vld [vmem:[#allocation9 + $0x18] sm:$0xff]
    %v195 = vld [vmem:[#allocation9 + $0x20] sm:$0xff]
    %v196 = vld [vmem:[#allocation9 + $0x28] sm:$0xff]
    %v197 = vld [vmem:[#allocation9 + $0x30] sm:$0xff]
    %v198 = vld [vmem:[#allocation9 + $0x38] sm:$0xff]
    %v199 = vld [vmem:[#allocation9 + $0x40] sm:$0xff]
    %v200 = vld [vmem:[#allocation9 + $0x48] sm:$0xff]
    %v201 = vld [vmem:[#allocation9 + $0x50] sm:$0xff]
    %v202 = vld [vmem:[#allocation9 + $0x58] sm:$0xff]
    %v203 = vld [vmem:[#allocation9 + $0x60] sm:$0xff]
    %v204 = vld [vmem:[#allocation9 + $0x68] sm:$0xff]
    %v205 = vld [vmem:[#allocation9 + $0x70] sm:$0xff]
    %v206 = vld [vmem:[#allocation9 + $0x78] sm:$0xff]
    %v207 = vld [vmem:[#allocation9 + $0x80] sm:$0xff]
    %v208 = vld [vmem:[#allocation9 + $0x88] sm:$0xff]
    %v209 = vld [vmem:[#allocation9 + $0x90] sm:$0xff]
    %v210 = vld [vmem:[#allocation9 + $0x98] sm:$0xff]
    %v211 = vld [vmem:[#allocation9 + $0xa0] sm:$0xff]
    %v212 = vld [vmem:[#allocation9 + $0xa8] sm:$0xff]
    %v213 = vld [vmem:[#allocation9 + $0xb0] sm:$0xff]
    %v214 = vld [vmem:[#allocation9 + $0xb8] sm:$0xff]
    %v215 = vld [vmem:[#allocation9 + $0xc0] sm:$0xff]
    %v216 = vld [vmem:[#allocation9 + $0xc8] sm:$0xff]
    %v217 = vld [vmem:[#allocation9 + $0xd0] sm:$0xff]
    %v218 = vld [vmem:[#allocation9 + $0xd8] sm:$0xff]
    %v219 = vld [vmem:[#allocation9 + $0xe0] sm:$0xff]
    %v220 = vld [vmem:[#allocation9 + $0xe8] sm:$0xff]
    %v221 = vld [vmem:[#allocation9 + $0xf0] sm:$0xff]
    %v222 = vld [vmem:[#allocation9 + $0xf8] sm:$0xff]
    %v223 = vld [vmem:[%s5] sm:$0x1]
    %v225 = vlaneseq
    %v226 = vshrl.u32 %v225, 7
    %v227 = vsub.s32 0, %v226
    %v228 = vrot.slane %v223, %v227
    %230 = vmatprep.subr.mxu0 0.0
    %231 = vmatpush1.msra.mxu0 %v191
    %232 = vmatprep.subr.mxu0 0.0
    %233 = vmatpush1.msra.mxu0 %v192
    %234 = vmatprep.subr.mxu0 0.0
    %235 = vmatpush1.msra.mxu0 %v193
    %236 = vmatprep.subr.mxu0 0.0
    %237 = vmatpush1.msra.mxu0 %v194
    %238 = vmatprep.subr.mxu0 0.0
    %239 = vmatpush1.msra.mxu0 %v195
    %240 = vmatprep.subr.mxu0 0.0
    %241 = vmatpush1.msra.mxu0 %v196
    %242 = vmatprep.subr.mxu0 0.0
    %243 = vmatpush1.msra.mxu0 %v197
    %244 = vmatprep.subr.mxu0 0.0
    %245 = vmatpush1.msra.mxu0 %v198
    %246 = vmatprep.subr.mxu0 0.0
    %247 = vmatpush1.msra.mxu0 %v199
    %248 = vmatprep.subr.mxu0 0.0
    %249 = vmatpush1.msra.mxu0 %v200
    %250 = vmatprep.subr.mxu0 0.0
    %251 = vmatpush1.msra.mxu0 %v201
    %252 = vmatprep.subr.mxu0 0.0
    %253 = vmatpush1.msra.mxu0 %v202
    %254 = vmatprep.subr.mxu0 0.0
    %255 = vmatpush1.msra.mxu0 %v203
    %256 = vmatprep.subr.mxu0 0.0
    %257 = vmatpush1.msra.mxu0 %v204
    %258 = vmatprep.subr.mxu0 0.0
    %259 = vmatpush1.msra.mxu0 %v205
    %260 = vmatprep.subr.mxu0 0.0
    %261 = vmatpush1.msra.mxu0 %v206
    %262 = vmatprep.subr.mxu0 0.0
    %263 = vmatpush1.msra.mxu0 %v207
    %264 = vmatprep.subr.mxu0 0.0
    %265 = vmatpush1.msra.mxu0 %v208
    %266 = vmatprep.subr.mxu0 0.0
    %267 = vmatpush1.msra.mxu0 %v209
    %268 = vmatprep.subr.mxu0 0.0
    %269 = vmatpush1.msra.mxu0 %v210
    %270 = vmatprep.subr.mxu0 0.0
    %271 = vmatpush1.msra.mxu0 %v211
    %272 = vmatprep.subr.mxu0 0.0
    %273 = vmatpush1.msra.mxu0 %v212
    %274 = vmatprep.subr.mxu0 0.0
    %275 = vmatpush1.msra.mxu0 %v213
    %276 = vmatprep.subr.mxu0 0.0
    %277 = vmatpush1.msra.mxu0 %v214
    %278 = vmatprep.subr.mxu0 0.0
    %279 = vmatpush1.msra.mxu0 %v215
    %280 = vmatprep.subr.mxu0 0.0
    %281 = vmatpush1.msra.mxu0 %v216
    %282 = vmatprep.subr.mxu0 0.0
    %283 = vmatpush1.msra.mxu0 %v217
    %284 = vmatprep.subr.mxu0 0.0
    %285 = vmatpush1.msra.mxu0 %v218
    %286 = vmatprep.subr.mxu0 0.0
    %287 = vmatpush1.msra.mxu0 %v219
    %288 = vmatprep.subr.mxu0 0.0
    %289 = vmatpush1.msra.mxu0 %v220
    %290 = vmatprep.subr.mxu0 0.0
    %291 = vmatpush1.msra.mxu0 %v221
    %292 = vmatprep.subr.mxu0 0.0
    %293 = vmatpush1.msra.mxu0 %v222
    %294 = vmatprep.mubr.f32.mxu0 %v188
    %295 = vmatmul.mubr.f32.gmra.mrb[0].mxu0 %v187
    %v296 = vpop.f32.mrb[0].mxu0
    %v297 = vadd.f32 %v228, %v296
    %v298 = vpop.f32.mrb[0].mxu0
    %299 = vmatprep.mubr.f32.mxu0 %v190
    %300 = vmatmul.mubr.f32.gmra.mrb[0].mxu0 %v189
    %v301 = vpop.f32.mrb[0].mxu0
    %v302 = vadd.f32 %v228, %v301
    %v303 = vpop.f32.mrb[0].mxu0
    %304 = vdwg.mxu0
    %305 = vst [vmem:[#allocation10] sm:$0xff] %v297
    %306 = vst [vmem:[#allocation10 + $0x8] sm:$0xff] %v302
    // Predicated region
    $region34: #{tpu_custom_call.1} parent=1 // pred_check
      _
    $region35: #{tpu_custom_call.1} parent=1 // pred_check_branch
      %308 = sbr.rel (0) target = $region37
    $region36: #{tpu_custom_call.1} parent=1 // pred_region
      %s310 = ssub.s32 256, 256
      %311 = vsyncadd [#allocation6], %s310
      %s312 = sshll.u32 [#allocation10], 4
      %s313 = int_to_ptr.vmem [resolvable:$true] %s312
      %318 = dma.vmem_to_hbm [thread:$0]  %s313, 256, %s6, [#allocation6], 128, 128, 8
    $region37: #{tpu_custom_call.1} parent=1 // pred_fallthru
      _
    // Predicated region
    $region38: #{tpu_custom_call.1} parent=1 // pred_check
      _
    $region39: #{tpu_custom_call.1} parent=1 // pred_check_branch
      %320 = sbr.rel (0) target = $region41
    $region40: #{tpu_custom_call.1} parent=1 // pred_region
      %321 = dma.done [#allocation6], 256
    $region41: #{tpu_custom_call.1} parent=1 // pred_fallthru
      _
    %322 = vsyncpa [#allocation5], 1
    %323 = vsyncpa [#allocation8], 1
    %324 = vsyncpa [#allocation6], 1

</llo_original>
